<compile_context>
chip_gen: v7x
topology: tpu7x:2x2x1
jax: 0.10.0
libtpu: 0.0.40
codegen_flags: <defaults>
</compile_context>

<pallas_src>
import jax
import jax.numpy as jnp
from jax.experimental import pallas as pl
from jax.experimental.pallas import tpu as pltpu

LANE = 128            # TPU vreg lane width
MAX_BATCH_TILE = 128  # batch rows per grid step (multiple of 8 sublanes)


def _make_mlp_kernel(n_layers):
    """Kernel factory.  Refs are ordered (x, w0, b0, ..., w{n-1}, b{n-1}, out)."""

    def kernel(*refs):
        x_ref = refs[0]
        out_ref = refs[-1]
        acc = x_ref[...]                                  # f32, no redundant upcast
        for l in range(n_layers):
            w_ref = refs[1 + 2 * l]
            b_ref = refs[2 + 2 * l]
            acc = (jnp.dot(acc, w_ref[...],
                           preferred_element_type=jnp.float32)
                   + b_ref[...])
        out_ref[...] = acc.astype(out_ref.dtype)          # lane-dense unmasked store

    return kernel


def init_params(key, layer_sizes, init_std=0.1):
    """nn.Linear-style params, stored transposed: w is (in, out), b is (1, out).

    Biases are made nonzero here (unlike the module's init_weights zeros) so
    the kernel's bias path is actually exercised by the correctness check.
    """
    params = []
    ks = jax.random.split(key, len(layer_sizes) - 1)
    for k, fin, fout in zip(ks, layer_sizes[:-1], layer_sizes[1:]):
        kw, kb = jax.random.split(k)
        w = init_std * jax.random.normal(kw, (fin, fout), jnp.float32)
        b = init_std * jax.random.normal(kb, (1, fout), jnp.float32)
        params.append((w, b))
    return params


def prepare_params(params):
    """One-time prep (not per-call work): zero-pad the final layer's
    out_features up to a multiple of 128 lanes so output stores are unmasked."""
    w_last, b_last = params[-1]
    fout = w_last.shape[1]
    fpad = pl.cdiv(fout, LANE) * LANE
    if fpad != fout:
        w_last = jnp.zeros((w_last.shape[0], fpad), w_last.dtype).at[:, :fout].set(w_last)
        b_last = jnp.zeros((1, fpad), b_last.dtype).at[:, :fout].set(b_last)
    return list(params[:-1]) + [(w_last, b_last)], fout


def task_pool_head(x, padded_params, num_tasks):
    """Pallas forward: step_scores (B, num_steps) -> task scores (B, num_tasks)."""
    batch, in_feat = x.shape
    n_layers = len(padded_params)
    out_feat = padded_params[-1][0].shape[1]              # lane-padded width

    # Batch tiling: whole batch in one block when small; 128-row tiles (rows are
    # independent, so partial/padded tail blocks are harmless) when large.
    tile_b = batch if batch <= MAX_BATCH_TILE else MAX_BATCH_TILE
    grid = (pl.cdiv(batch, tile_b),)

    in_specs = [pl.BlockSpec((tile_b, in_feat), lambda i: (i, 0))]
    flat_args = [x]
    for w, b in padded_params:
        in_specs.append(pl.BlockSpec(w.shape, lambda i: (0, 0)))   # weights resident
        in_specs.append(pl.BlockSpec(b.shape, lambda i: (0, 0)))   # biases resident
        flat_args += [w, b]

    # Advisory cost estimate so XLA can schedule/overlap this tiny custom call.
    flops = 0
    bytes_accessed = x.size * x.dtype.itemsize + batch * out_feat * 4
    for w, b in padded_params:
        flops += 2 * batch * w.shape[0] * w.shape[1]
        bytes_accessed += w.size * w.dtype.itemsize + b.size * b.dtype.itemsize

    out_padded = pl.pallas_call(
        _make_mlp_kernel(n_layers),
        out_shape=jax.ShapeDtypeStruct((batch, out_feat), jnp.float32),
        grid=grid,
        in_specs=in_specs,
        out_specs=pl.BlockSpec((tile_b, out_feat), lambda i: (i, 0)),
        compiler_params=pltpu.CompilerParams(
            dimension_semantics=("parallel",)),           # v7x: 2 TCs split batch tiles
        cost_estimate=pl.CostEstimate(
            flops=flops, transcendentals=0, bytes_accessed=bytes_accessed),
    )(*flat_args)

    return out_padded[:, :num_tasks]                      # drop zero-padded lanes


def reference_forward(x, params):
    """Pure-JAX reference matching the PyTorch module."""
    s = x
    for w, b in params:
        s = s @ w + b
    return s


if __name__ == "__main__":
    num_steps, num_tasks = 8, 4
    middle_layers = [32]                                  # [num_steps] + middle + [num_tasks]
    batch = 2
    layer_sizes = [num_steps] + middle_layers + [num_tasks]

    key = jax.random.PRNGKey(0)
    k_x, k_p = jax.random.split(key)
    x = jax.random.normal(k_x, (batch, num_steps), jnp.float32)   # pooled step scores
    params = init_params(k_p, layer_sizes, init_std=0.1)

    padded_params, nt = prepare_params(params)            # one-time lane-padding prep
    scores = task_pool_head(x, padded_params, nt)
    jax.block_until_ready(scores)

    ref = reference_forward(x, params)
    assert scores.shape == (batch, num_tasks)
    assert jnp.allclose(scores, ref, atol=1e-5), "task scores mismatch"

    print("KERNEL_OK")
</pallas_src>

<mosaic_0001>
module attributes {stable_mosaic.version = 11 : i64} {
  func.func @kernel(%arg0: i32, %arg1: memref<2x8xf32, #tpu.memory_space<vmem>>, %arg2: memref<8x32xf32, #tpu.memory_space<vmem>>, %arg3: memref<1x32xf32, #tpu.memory_space<vmem>>, %arg4: memref<32x128xf32, #tpu.memory_space<vmem>>, %arg5: memref<1x128xf32, #tpu.memory_space<vmem>>, %arg6: memref<2x128xf32, #tpu.memory_space<vmem>>) attributes {dimension_semantics = [#tpu.dimension_semantics<parallel>], iteration_bounds = array<i64: 1>, scalar_prefetch = 0 : i64, scratch_operands = 0 : i64, tpu.core_type = #tpu.core_type<tc>, window_params = [{transform_indices = @transform_0, window_bounds = array<i64: 2, 8>}, {pipeline_mode = #tpu.pipeline_mode<synchronous>, transform_indices = @transform_1, window_bounds = array<i64: 8, 32>}, {pipeline_mode = #tpu.pipeline_mode<synchronous>, transform_indices = @transform_2, window_bounds = array<i64: 1, 32>}, {pipeline_mode = #tpu.pipeline_mode<synchronous>, transform_indices = @transform_3, window_bounds = array<i64: 32, 128>}, {pipeline_mode = #tpu.pipeline_mode<synchronous>, transform_indices = @transform_4, window_bounds = array<i64: 1, 128>}, {transform_indices = @transform_5, window_bounds = array<i64: 2, 128>}]} {
    %c0 = arith.constant 0 : index
    %c0_0 = arith.constant 0 : index
    %0 = vector.load %arg1[%c0, %c0_0] : memref<2x8xf32, #tpu.memory_space<vmem>>, vector<2x8xf32>
    %c0_1 = arith.constant 0 : index
    %c0_2 = arith.constant 0 : index
    %1 = vector.load %arg2[%c0_1, %c0_2] : memref<8x32xf32, #tpu.memory_space<vmem>>, vector<8x32xf32>
    %cst = arith.constant dense<0.000000e+00> : vector<2x32xf32>
    %2 = tpu.matmul %0, %1, %cst {dimension_numbers = #tpu.dot_dimension_numbers<[1], [0], [0], [1], [0, 0, 1, 1], [], []>} : vector<2x8xf32>, vector<8x32xf32>, vector<2x32xf32> -> vector<2x32xf32>
    %c0_3 = arith.constant 0 : index
    %c0_4 = arith.constant 0 : index
    %3 = vector.load %arg3[%c0_3, %c0_4] : memref<1x32xf32, #tpu.memory_space<vmem>>, vector<1x32xf32>
    %4 = vector.broadcast %3 : vector<1x32xf32> to vector<2x32xf32>
    %5 = arith.addf %2, %4 : vector<2x32xf32>
    %c0_5 = arith.constant 0 : index
    %c0_6 = arith.constant 0 : index
    %6 = vector.load %arg4[%c0_5, %c0_6] : memref<32x128xf32, #tpu.memory_space<vmem>>, vector<32x128xf32>
    %cst_7 = arith.constant dense<0.000000e+00> : vector<2x128xf32>
    %7 = tpu.matmul %5, %6, %cst_7 {dimension_numbers = #tpu.dot_dimension_numbers<[1], [0], [0], [1], [0, 0, 1, 1], [], []>} : vector<2x32xf32>, vector<32x128xf32>, vector<2x128xf32> -> vector<2x128xf32>
    %c0_8 = arith.constant 0 : index
    %c0_9 = arith.constant 0 : index
    %8 = vector.load %arg5[%c0_8, %c0_9] : memref<1x128xf32, #tpu.memory_space<vmem>>, vector<1x128xf32>
    %9 = vector.broadcast %8 : vector<1x128xf32> to vector<2x128xf32>
    %10 = arith.addf %7, %9 : vector<2x128xf32>
    %c0_10 = arith.constant 0 : index
    %c0_11 = arith.constant 0 : index
    %11 = vector.load %arg6[%c0_10, %c0_11] : memref<2x128xf32, #tpu.memory_space<vmem>>, vector<2x128xf32>
    tpu.vector_store %arg6[%c0_10, %c0_11], %10 {strides = array<i32>} : memref<2x128xf32, #tpu.memory_space<vmem>>, vector<2x128xf32>,
    return
  }
  func.func @transform_0(%arg0: i32) -> (i32, i32) {
    %c0_i32 = arith.constant 0 : i32
    %c0_i32_0 = arith.constant 0 : i32
    return %arg0, %c0_i32 : i32, i32
  }
  func.func @transform_1(%arg0: i32) -> (i32, i32) {
    %c0_i32 = arith.constant 0 : i32
    %c0_i32_0 = arith.constant 0 : i32
    %c0_i32_1 = arith.constant 0 : i32
    return %c0_i32, %c0_i32_0 : i32, i32
  }
  func.func @transform_2(%arg0: i32) -> (i32, i32) {
    %c0_i32 = arith.constant 0 : i32
    %c0_i32_0 = arith.constant 0 : i32
    %c0_i32_1 = arith.constant 0 : i32
    return %c0_i32, %c0_i32_0 : i32, i32
  }
  func.func @transform_3(%arg0: i32) -> (i32, i32) {
    %c0_i32 = arith.constant 0 : i32
    %c0_i32_0 = arith.constant 0 : i32
    %c0_i32_1 = arith.constant 0 : i32
    return %c0_i32, %c0_i32_0 : i32, i32
  }
  func.func @transform_4(%arg0: i32) -> (i32, i32) {
    %c0_i32 = arith.constant 0 : i32
    %c0_i32_0 = arith.constant 0 : i32
    %c0_i32_1 = arith.constant 0 : i32
    return %c0_i32, %c0_i32_0 : i32, i32
  }
  func.func @transform_5(%arg0: i32) -> (i32, i32) {
    %c0_i32 = arith.constant 0 : i32
    %c0_i32_0 = arith.constant 0 : i32
    return %arg0, %c0_i32 : i32, i32
  }
}

</mosaic_0001>

<llo_original>
// kernel: tpu_custom_call.1
$region0: #{tpu_custom_call.1}
  #allocation0 [shape = 'u32[]', space=smem, size = 0x4, offset = 0x4, fixed_abs, tag = 'smem constant byte address 0x4 - core index']
  #allocation1 [shape = 'u32[144,128]{1,0:T(1,128)}', space=vmem, size = 0x12000, scoped, tag = 'internal scratch']
  %s0 = inlined_call_operand.hbm [shape: f32[2,8], index: 0, kind: input, shape index: {}]
  %s1 = inlined_call_operand.hbm [shape: f32[8,32], index: 1, kind: input, shape index: {}]
  %s2 = inlined_call_operand.vmem [shape: f32[1,32], index: 2, kind: input, shape index: {}]
  %s3 = inlined_call_operand.hbm [shape: f32[32,128], index: 3, kind: input, shape index: {}]
  %s4 = inlined_call_operand.vmem [shape: f32[1,128], index: 4, kind: input, shape index: {}]
  %s5 = inlined_call_operand.hbm [shape: f32[2,128], index: 5, kind: output, shape index: {}]
  %s6 = sld [smem:[#allocation0]]
  $region42: #{tpu_custom_call.1} parent=0
    _
  %s8 = ssub.s32 1, %s6
  %s9 = scalar_select 0, %s8, %s6
  $region1: #{tpu_custom_call.1} parent=0
    #allocation2 [shape = 'u8[1024]{0}', space=vmem, size = 0x400, scoped, tag = 'input window, operand 0, single buffered']
    #allocation3 [shape = 's32[1]{0}', space=sflag, size = 0x4, scoped, tag = 'scoped memory for tpu_custom_call.1']
    #allocation4 [shape = 's32[1]{0}', space=sflag, size = 0x4, scoped, tag = 'scoped memory for tpu_custom_call.1']
    #allocation5 [shape = 'u8[4096]{0}', space=vmem, size = 0x1000, scoped, tag = 'input window, operand 1, single buffered']
    #allocation6 [shape = 's32[1]{0}', space=sflag, size = 0x4, scoped, tag = 'scoped memory for tpu_custom_call.1']
    #allocation7 [shape = 'u8[16384]{0}', space=vmem, size = 0x4000, scoped, tag = 'input window, operand 3, single buffered']
    #allocation8 [shape = 'u8[1024]{0}', space=vmem, size = 0x400, scoped, tag = 'output window, operand 0, single buffered']
    %10 = vsyncpa [#allocation3], 0
    %11 = vsyncpa [#allocation6], 0
    %12 = vsyncpa [#allocation4], 0
    // Predicated region
    $region2: #{tpu_custom_call.1} parent=1 // pred_check
      _
    $region3: #{tpu_custom_call.1} parent=1 // pred_check_branch
      %14 = sbr.rel (0) target = $region5
    $region4: #{tpu_custom_call.1} parent=1 // pred_region
      %s16 = ssub.s32 32, 32
      %17 = vsyncadd [#allocation3], %s16
      %s19 = sshll.u32 [#allocation2], 4
      %s20 = int_to_ptr.vmem [resolvable:$true] %s19
      %22 = dma.hbm_to_vmem [thread:$0]  %s0, 32, %s20, [#allocation3]
    $region5: #{tpu_custom_call.1} parent=1 // pred_fallthru
      _
    // Predicated region
    $region6: #{tpu_custom_call.1} parent=1 // pred_check
      _
    $region7: #{tpu_custom_call.1} parent=1 // pred_check_branch
      %24 = sbr.rel (0) target = $region9
    $region8: #{tpu_custom_call.1} parent=1 // pred_region
      %s26 = ssub.s32 128, 128
      %27 = vsyncadd [#allocation6], %s26
      %s29 = sshll.u32 [#allocation5], 4
      %s30 = int_to_ptr.vmem [resolvable:$true] %s29
      %32 = dma.hbm_to_vmem [thread:$0]  %s1, 128, %s30, [#allocation6]
    $region9: #{tpu_custom_call.1} parent=1 // pred_fallthru
      _
    // Predicated region
    $region10: #{tpu_custom_call.1} parent=1 // pred_check
      _
    $region11: #{tpu_custom_call.1} parent=1 // pred_check_branch
      %34 = sbr.rel (0) target = $region13
    $region12: #{tpu_custom_call.1} parent=1 // pred_region
      _
    $region13: #{tpu_custom_call.1} parent=1 // pred_fallthru
      _
    // Predicated region
    $region14: #{tpu_custom_call.1} parent=1 // pred_check
      _
    $region15: #{tpu_custom_call.1} parent=1 // pred_check_branch
      %36 = sbr.rel (0) target = $region17
    $region16: #{tpu_custom_call.1} parent=1 // pred_region
      %s38 = ssub.s32 512, 512
      %39 = vsyncadd [#allocation6], %s38
      %s40 = sshll.u32 [#allocation7], 4
      %s41 = int_to_ptr.vmem [resolvable:$true] %s40
      %46 = dma.hbm_to_vmem [thread:$0]  %s3, 512, %s41, [#allocation6], 128, 128, 8
    $region17: #{tpu_custom_call.1} parent=1 // pred_fallthru
      _
    // Predicated region
    $region18: #{tpu_custom_call.1} parent=1 // pred_check
      _
    $region19: #{tpu_custom_call.1} parent=1 // pred_check_branch
      %48 = sbr.rel (0) target = $region21
    $region20: #{tpu_custom_call.1} parent=1 // pred_region
      _
    $region21: #{tpu_custom_call.1} parent=1 // pred_fallthru
      _
    // Predicated region
    $region22: #{tpu_custom_call.1} parent=1 // pred_check
      _
    $region23: #{tpu_custom_call.1} parent=1 // pred_check_branch
      %50 = sbr.rel (0) target = $region25
    $region24: #{tpu_custom_call.1} parent=1 // pred_region
      %51 = dma.done [#allocation3], 32
    $region25: #{tpu_custom_call.1} parent=1 // pred_fallthru
      _
    // Predicated region
    $region26: #{tpu_custom_call.1} parent=1 // pred_check
      _
    $region27: #{tpu_custom_call.1} parent=1 // pred_check_branch
      %53 = sbr.rel (0) target = $region29
    $region28: #{tpu_custom_call.1} parent=1 // pred_region
      %54 = dma.done [#allocation6], 128
    $region29: #{tpu_custom_call.1} parent=1 // pred_fallthru
      _
    // Predicated region
    $region30: #{tpu_custom_call.1} parent=1 // pred_check
      _
    $region31: #{tpu_custom_call.1} parent=1 // pred_check_branch
      %56 = sbr.rel (0) target = $region33
    $region32: #{tpu_custom_call.1} parent=1 // pred_region
      %57 = dma.done [#allocation6], 512
    $region33: #{tpu_custom_call.1} parent=1 // pred_fallthru
      _
    %v58 = vld [vmem:[#allocation2] sm:$0x3]
    %v59 = vld [vmem:[#allocation5] sm:$0xff]
    %v60 = vld [vmem:[%s2] sm:$0x1]
    %v62 = vlaneseq
    %v63 = vshrl.u32 %v62, 7
    %v64 = vsub.s32 0, %v63
    %v65 = vrot.slane %v60, %v64
    %vm67 = vcmask 64512
    %v69 = vsel %vm67, %v58, 0
    %71 = vmatprep.subr.mxu0 0.0
    %72 = vmatpush1.msra.mxu0 %v59
    %73 = vmatprep.subr.mxu0 0.0
    %74 = vmatpush1.msra.mxu0 0.0
    %75 = vmatprep.subr.mxu0 0.0
    %76 = vmatpush1.msra.mxu0 0.0
    %77 = vmatprep.subr.mxu0 0.0
    %78 = vmatpush1.msra.mxu0 0.0
    %79 = vmatprep.subr.mxu0 0.0
    %80 = vmatpush1.msra.mxu0 0.0
    %81 = vmatprep.subr.mxu0 0.0
    %82 = vmatpush1.msra.mxu0 0.0
    %83 = vmatprep.subr.mxu0 0.0
    %84 = vmatpush1.msra.mxu0 0.0
    %85 = vmatprep.subr.mxu0 0.0
    %86 = vmatpush1.msra.mxu0 0.0
    %87 = vmatprep.subr.mxu0 0.0
    %88 = vmatpush1.msra.mxu0 0.0
    %89 = vmatprep.subr.mxu0 0.0
    %90 = vmatpush1.msra.mxu0 0.0
    %91 = vmatprep.subr.mxu0 0.0
    %92 = vmatpush1.msra.mxu0 0.0
    %93 = vmatprep.subr.mxu0 0.0
    %94 = vmatpush1.msra.mxu0 0.0
    %95 = vmatprep.subr.mxu0 0.0
    %96 = vmatpush1.msra.mxu0 0.0
    %97 = vmatprep.subr.mxu0 0.0
    %98 = vmatpush1.msra.mxu0 0.0
    %99 = vmatprep.subr.mxu0 0.0
    %100 = vmatpush1.msra.mxu0 0.0
    %101 = vmatprep.subr.mxu0 0.0
    %102 = vmatpush1.msra.mxu0 0.0
    %103 = vmatprep.subr.mxu0 0.0
    %104 = vmatpush1.msra.mxu0 0.0
    %105 = vmatprep.subr.mxu0 0.0
    %106 = vmatpush1.msra.mxu0 0.0
    %107 = vmatprep.subr.mxu0 0.0
    %108 = vmatpush1.msra.mxu0 0.0
    %109 = vmatprep.subr.mxu0 0.0
    %110 = vmatpush1.msra.mxu0 0.0
    %111 = vmatprep.subr.mxu0 0.0
    %112 = vmatpush1.msra.mxu0 0.0
    %113 = vmatprep.subr.mxu0 0.0
    %114 = vmatpush1.msra.mxu0 0.0
    %115 = vmatprep.subr.mxu0 0.0
    %116 = vmatpush1.msra.mxu0 0.0
    %117 = vmatprep.subr.mxu0 0.0
    %118 = vmatpush1.msra.mxu0 0.0
    %119 = vmatprep.subr.mxu0 0.0
    %120 = vmatpush1.msra.mxu0 0.0
    %121 = vmatprep.subr.mxu0 0.0
    %122 = vmatpush1.msra.mxu0 0.0
    %123 = vmatprep.subr.mxu0 0.0
    %124 = vmatpush1.msra.mxu0 0.0
    %125 = vmatprep.subr.mxu0 0.0
    %126 = vmatpush1.msra.mxu0 0.0
    %127 = vmatprep.subr.mxu0 0.0
    %128 = vmatpush1.msra.mxu0 0.0
    %129 = vmatprep.subr.mxu0 0.0
    %130 = vmatpush1.msra.mxu0 0.0
    %131 = vmatprep.subr.mxu0 0.0
    %132 = vmatpush1.msra.mxu0 0.0
    %133 = vmatprep.subr.mxu0 0.0
    %134 = vmatpush1.msra.mxu0 0.0
    %135 = vmatprep.mubr.f32.mxu0 0.0
    %136 = vmatmul.mubr.f32.gmra.mrb[0].mxu0 %v69
    %v137 = vpop.f32.mrb[0].mxu0
    %v138 = vadd.f32 %v65, %v137
    %v139 = vpop.f32.mrb[0].mxu0
    %140 = vdwg.mxu0
    %v141 = vld [vmem:[#allocation7] sm:$0xff]
    %v142 = vld [vmem:[#allocation7 + $0x8] sm:$0xff]
    %v143 = vld [vmem:[#allocation7 + $0x10] sm:$0xff]
    %v144 = vld [vmem:[#allocation7 + $0x18] sm:$0xff]
    %v145 = vld [vmem:[%s4] sm:$0x1]
    %v147 = vlaneseq
    %v148 = vshrl.u32 %v147, 7
    %v149 = vsub.s32 0, %v148
    %v150 = vrot.slane %v145, %v149
    %vm152 = vcmask 261120
    %v154 = vsel %vm152, %v138, 0
    %156 = vmatprep.subr.mxu0 0.0
    %157 = vmatpush1.msra.mxu0 %v141
    %158 = vmatprep.subr.mxu0 0.0
    %159 = vmatpush1.msra.mxu0 %v142
    %160 = vmatprep.subr.mxu0 0.0
    %161 = vmatpush1.msra.mxu0 %v143
    %162 = vmatprep.subr.mxu0 0.0
    %163 = vmatpush1.msra.mxu0 %v144
    %164 = vmatprep.subr.mxu0 0.0
    %165 = vmatpush1.msra.mxu0 0.0
    %166 = vmatprep.subr.mxu0 0.0
    %167 = vmatpush1.msra.mxu0 0.0
    %168 = vmatprep.subr.mxu0 0.0
    %169 = vmatpush1.msra.mxu0 0.0
    %170 = vmatprep.subr.mxu0 0.0
    %171 = vmatpush1.msra.mxu0 0.0
    %172 = vmatprep.subr.mxu0 0.0
    %173 = vmatpush1.msra.mxu0 0.0
    %174 = vmatprep.subr.mxu0 0.0
    %175 = vmatpush1.msra.mxu0 0.0
    %176 = vmatprep.subr.mxu0 0.0
    %177 = vmatpush1.msra.mxu0 0.0
    %178 = vmatprep.subr.mxu0 0.0
    %179 = vmatpush1.msra.mxu0 0.0
    %180 = vmatprep.subr.mxu0 0.0
    %181 = vmatpush1.msra.mxu0 0.0
    %182 = vmatprep.subr.mxu0 0.0
    %183 = vmatpush1.msra.mxu0 0.0
    %184 = vmatprep.subr.mxu0 0.0
    %185 = vmatpush1.msra.mxu0 0.0
    %186 = vmatprep.subr.mxu0 0.0
    %187 = vmatpush1.msra.mxu0 0.0
    %188 = vmatprep.subr.mxu0 0.0
    %189 = vmatpush1.msra.mxu0 0.0
    %190 = vmatprep.subr.mxu0 0.0
    %191 = vmatpush1.msra.mxu0 0.0
    %192 = vmatprep.subr.mxu0 0.0
    %193 = vmatpush1.msra.mxu0 0.0
    %194 = vmatprep.subr.mxu0 0.0
    %195 = vmatpush1.msra.mxu0 0.0
    %196 = vmatprep.subr.mxu0 0.0
    %197 = vmatpush1.msra.mxu0 0.0
    %198 = vmatprep.subr.mxu0 0.0
    %199 = vmatpush1.msra.mxu0 0.0
    %200 = vmatprep.subr.mxu0 0.0
    %201 = vmatpush1.msra.mxu0 0.0
    %202 = vmatprep.subr.mxu0 0.0
    %203 = vmatpush1.msra.mxu0 0.0
    %204 = vmatprep.subr.mxu0 0.0
    %205 = vmatpush1.msra.mxu0 0.0
    %206 = vmatprep.subr.mxu0 0.0
    %207 = vmatpush1.msra.mxu0 0.0
    %208 = vmatprep.subr.mxu0 0.0
    %209 = vmatpush1.msra.mxu0 0.0
    %210 = vmatprep.subr.mxu0 0.0
    %211 = vmatpush1.msra.mxu0 0.0
    %212 = vmatprep.subr.mxu0 0.0
    %213 = vmatpush1.msra.mxu0 0.0
    %214 = vmatprep.subr.mxu0 0.0
    %215 = vmatpush1.msra.mxu0 0.0
    %216 = vmatprep.subr.mxu0 0.0
    %217 = vmatpush1.msra.mxu0 0.0
    %218 = vmatprep.subr.mxu0 0.0
    %219 = vmatpush1.msra.mxu0 0.0
    %220 = vmatprep.mubr.f32.mxu0 0.0
    %221 = vmatmul.mubr.f32.gmra.mrb[0].mxu0 %v154
    %v222 = vpop.f32.mrb[0].mxu0
    %v223 = vadd.f32 %v150, %v222
    %v224 = vpop.f32.mrb[0].mxu0
    %225 = vdwg.mxu0
    %226 = vst [vmem:[#allocation8] sm:$0x3] %v223
    // Predicated region
    $region34: #{tpu_custom_call.1} parent=1 // pred_check
      _
    $region35: #{tpu_custom_call.1} parent=1 // pred_check_branch
      %228 = sbr.rel (0) target = $region37
    $region36: #{tpu_custom_call.1} parent=1 // pred_region
      %s230 = ssub.s32 32, 32
      %231 = vsyncadd [#allocation4], %s230
      %s233 = sshll.u32 [#allocation8], 4
      %s234 = int_to_ptr.vmem [resolvable:$true] %s233
      %236 = dma.vmem_to_hbm [thread:$0]  %s234, 32, %s5, [#allocation4]
    $region37: #{tpu_custom_call.1} parent=1 // pred_fallthru
      _
    // Predicated region
    $region38: #{tpu_custom_call.1} parent=1 // pred_check
      _
    $region39: #{tpu_custom_call.1} parent=1 // pred_check_branch
      %238 = sbr.rel (0) target = $region41
    $region40: #{tpu_custom_call.1} parent=1 // pred_region
      %239 = dma.done [#allocation4], 32
    $region41: #{tpu_custom_call.1} parent=1 // pred_fallthru
      _
    %240 = vsyncpa [#allocation3], 1
    %241 = vsyncpa [#allocation6], 1
    %242 = vsyncpa [#allocation4], 1

</llo_original>
